<compile_context>
chip_gen: v7x
topology: tpu7x:2x2x1
jax: 0.10.0
libtpu: 0.0.40
codegen_flags: <defaults>
</compile_context>

<pallas_src>
import functools
import math

import jax
import jax.numpy as jnp
from jax.experimental import pallas as pl
from jax.experimental.pallas import tpu as pltpu


def _pick_tile(dim, target, align):
    """Largest multiple of `align` that divides `dim` and is <= `target`;
    falls back to the full dim (always a legal block size)."""
    if dim <= target:
        return dim
    t = (target // align) * align
    while t >= align:
        if dim % t == 0:
            return t
        t -= align
    return dim


# ---------------------------------------------------------------------------
# Kernel 1: tiled fused linear  y = x @ W + b   (used for c_attn and c_proj)
# ---------------------------------------------------------------------------
def _linear_kernel_acc(x_ref, w_ref, b_ref, o_ref, acc_ref):
    """Multi-step K accumulation (grid = (M/tm, N/tn, K/tk))."""
    k = pl.program_id(2)

    @pl.when(k == 0)
    def _init():
        acc_ref[...] = jnp.zeros_like(acc_ref)

    acc_ref[...] += jnp.dot(x_ref[...], w_ref[...],
                            preferred_element_type=jnp.float32)

    @pl.when(k == pl.num_programs(2) - 1)
    def _finalize():
        o_ref[...] = (acc_ref[...] + b_ref[...].astype(jnp.float32)
                      ).astype(o_ref.dtype)


def _linear_kernel_fullk(x_ref, w_ref, b_ref, o_ref):
    """Full-K contraction in one grid step (no accumulator revisit)."""
    o_ref[...] = (jnp.dot(x_ref[...], w_ref[...],
                          preferred_element_type=jnp.float32)
                  + b_ref[...].astype(jnp.float32)).astype(o_ref.dtype)


def linear(x2d, w, b, *, out_dtype=None, compute_dtype=jnp.bfloat16,
           block_m=256, block_n=512, block_k=None):
    """y = x2d @ w + b, tiled & software-pipelined, bf16 MXU / f32 accumulate."""
    M, K = x2d.shape
    K2, N = w.shape
    assert K == K2 and b.shape == (N,)
    out_dtype = x2d.dtype if out_dtype is None else out_dtype

    # bf16 operands: feeds the MXU at its native rate and halves HBM traffic.
    xc = x2d.astype(compute_dtype)
    wc = w.astype(compute_dtype)
    bc = b.astype(jnp.float32).reshape(1, N)

    tm = _pick_tile(M, block_m, 16)          # 16-row alignment for bf16 packing
    tn = _pick_tile(N, block_n, 128)
    tk = K if block_k is None else _pick_tile(K, block_k, 128)
    gm, gn, gk = M // tm, N // tn, K // tk

    out_isize = jnp.dtype(out_dtype).itemsize
    cost = pl.CostEstimate(
        flops=2 * M * N * K,
        transcendentals=0,
        bytes_accessed=int(xc.dtype.itemsize * (M * K * gn + K * N * gm)
                           + out_isize * M * N))

    # VMEM budget: 2 pipeline buffers per operand (+ f32 acc), capped at the
    # v7x physical 64 MiB.
    est = (2 * xc.dtype.itemsize * 2 * (tm * tk + tk * tn)
           + 2 * out_isize * tm * tn + 4 * tm * tn + 4 * 2 * tn)
    vmem_limit = int(min(max(2 * est, 32 * 1024 * 1024), 64 * 1024 * 1024))

    if gk == 1:
        return pl.pallas_call(
            _linear_kernel_fullk,
            out_shape=jax.ShapeDtypeStruct((M, N), out_dtype),
            grid=(gm, gn),
            in_specs=[
                pl.BlockSpec((tm, K), lambda i, j: (i, 0)),
                pl.BlockSpec((K, tn), lambda i, j: (0, j)),
                pl.BlockSpec((1, tn), lambda i, j: (0, j)),
            ],
            out_specs=pl.BlockSpec((tm, tn), lambda i, j: (i, j)),
            compiler_params=pltpu.CompilerParams(
                dimension_semantics=("parallel", "parallel"),
                vmem_limit_bytes=vmem_limit),
            cost_estimate=cost,
        )(xc, wc, bc)

    return pl.pallas_call(
        _linear_kernel_acc,
        out_shape=jax.ShapeDtypeStruct((M, N), out_dtype),
        grid=(gm, gn, gk),
        in_specs=[
            pl.BlockSpec((tm, tk), lambda i, j, k: (i, k)),
            pl.BlockSpec((tk, tn), lambda i, j, k: (k, j)),
            pl.BlockSpec((1, tn), lambda i, j, k: (0, j)),
        ],
        out_specs=pl.BlockSpec((tm, tn), lambda i, j, k: (i, j)),
        scratch_shapes=[pltpu.VMEM((tm, tn), jnp.float32)],
        compiler_params=pltpu.CompilerParams(
            dimension_semantics=("parallel", "parallel", "arbitrary"),
            vmem_limit_bytes=vmem_limit),
        cost_estimate=cost,
    )(xc, wc, bc)


# ---------------------------------------------------------------------------
# Kernel 2: flash-style causal attention, heads packed along lanes (B, T, C)
# ---------------------------------------------------------------------------
def _flash_attn_kernel(q_ref, k_ref, v_ref, o_ref, m_ref, l_ref, acc_ref,
                       *, n_head, d_head, scale, exp_dtype):
    qi = pl.program_id(1)          # q-block index
    ki = pl.program_id(2)          # kv-block index (innermost, "arbitrary")
    tq = q_ref.shape[1]
    tkv = k_ref.shape[1]

    @pl.when(ki == 0)
    def _init():
        m_ref[...] = jnp.full_like(m_ref, -jnp.inf)
        l_ref[...] = jnp.zeros_like(l_ref)
        acc_ref[...] = jnp.zeros_like(acc_ref)

    def process(apply_mask):
        if apply_mask:
            # Diagonal block only: qi == ki and tq == tkv, so the global
            # causality test reduces to col <= row.
            row = jax.lax.broadcasted_iota(jnp.int32, (tq, tkv), 0)
            col = jax.lax.broadcasted_iota(jnp.int32, (tq, tkv), 1)
            causal = col <= row
        for h in range(n_head):
            sl = slice(h * d_head, (h + 1) * d_head)
            # Per-head ref slices (no full (tq, C) tile held live -> no spills).
            q_h = q_ref[0, :, sl]          # (tq,  D) bf16
            k_h = k_ref[0, :, sl]          # (tkv, D) bf16
            # NT matmul: contract the head dim directly (no k transpose).
            s = jax.lax.dot_general(
                q_h, k_h, (((1,), (1,)), ((), ())),
                preferred_element_type=jnp.float32) * scale
            if apply_mask:
                s = jnp.where(causal, s, -jnp.inf)
            m_prev = m_ref[h]
            m_new = jnp.maximum(m_prev, jnp.max(s, axis=-1, keepdims=True))
            # bf16 exponentials: EUP bf16 path on v6e/v7x (set exp_dtype=f32 on v5e).
            alpha = jnp.exp((m_prev - m_new).astype(exp_dtype)
                            ).astype(jnp.float32)
            p = jnp.exp((s - m_new).astype(exp_dtype))
            l_ref[h] = alpha * l_ref[h] + jnp.sum(
                p.astype(jnp.float32), axis=-1, keepdims=True)
            v_h = v_ref[0, :, sl]          # (tkv, D) bf16
            acc_ref[h] = alpha * acc_ref[h] + jnp.dot(
                p.astype(v_h.dtype), v_h, preferred_element_type=jnp.float32)
            m_ref[h] = m_new

    # Fully visible kv block (below the diagonal): no mask work at all.
    @pl.when(ki < qi)
    def _visible_block():
        process(apply_mask=False)

    # Diagonal block: mask, then normalize & store immediately.  kv tiles with
    # ki > qi are pure no-ops (their K/V DMA is skipped by the clamped index
    # map, and neither compute nor stores run).
    @pl.when(ki == qi)
    def _diag_and_finalize():
        process(apply_mask=True)
        outs = []
        for h in range(n_head):
            inv_l = pl.reciprocal(l_ref[h], approx=True)     # EUP, once per tile
            outs.append((acc_ref[h] * inv_l).astype(o_ref.dtype))  # cast per head
        # Lane-dense store: one (tq, C) slab in the output dtype, heads merged.
        o_ref[0] = jnp.concatenate(outs, axis=-1)


def causal_attention_qkv(qkv, n_head, *, block_q=None, block_kv=None,
                         exp_dtype=jnp.bfloat16):
    """Causal multi-head attention over fused qkv of shape (B, T, 3*C).

    Returns (B, T, C) with heads merged (lane-dense) — no head transposes.
    """
    B, T, C3 = qkv.shape
    C = C3 // 3
    assert 3 * C == C3 and C % n_head == 0
    D = C // n_head

    t_default = _pick_tile(T, 512, 16)       # big tiles: fewer K/V re-reads,
    tq = t_default if block_q is None else block_q       # better MXU fill for D=64
    tkv = t_default if block_kv is None else block_kv
    assert tq == tkv, "square q/kv tiles required for diagonal-block pruning"
    assert T % tq == 0
    nq = nk = T // tq

    if C % 128 == 0:
        # Slice q / k / v straight out of the fused qkv tensor via the
        # index_map (block offsets 0, C, 2C along the lane axis).
        # K/V block indices are clamped to the diagonal: for pruned (ki > qi)
        # steps the index repeats, so Pallas skips the DMA entirely.
        operands = (qkv, qkv, qkv)
        q_map = lambda b, qi, ki: (b, qi, 0)
        k_map = lambda b, qi, ki: (b, jnp.minimum(ki, qi), 1)
        v_map = lambda b, qi, ki: (b, jnp.minimum(ki, qi), 2)
    else:
        # Fall back to an explicit split when C-wide blocks inside the 3C-wide
        # qkv are not 128-aligned (one extra HBM pass).
        q, k, v = jnp.split(qkv, 3, axis=-1)
        operands = (q, k, v)
        q_map = lambda b, qi, ki: (b, qi, 0)
        k_map = lambda b, qi, ki: (b, jnp.minimum(ki, qi), 0)
        v_map = lambda b, qi, ki: (b, jnp.minimum(ki, qi), 0)

    kernel = functools.partial(_flash_attn_kernel, n_head=n_head, d_head=D,
                               scale=1.0 / math.sqrt(D), exp_dtype=exp_dtype)
    isize = qkv.dtype.itemsize
    cost = pl.CostEstimate(
        flops=2 * B * n_head * T * T * D,                 # causal: ~half of dense
        transcendentals=B * n_head * T * T // 2,
        bytes_accessed=int(isize * B * T * C * (2 + nq)))

    est = (2 * isize * 2 * 3 * tq * C            # q/k/v double-buffered
           + 2 * isize * 2 * tq * C              # output double-buffered
           + 4 * (n_head * tq * D + 2 * n_head * tq))     # f32 acc + m/l
    vmem_limit = int(min(max(2 * est, 32 * 1024 * 1024), 64 * 1024 * 1024))

    return pl.pallas_call(
        kernel,
        out_shape=jax.ShapeDtypeStruct((B, T, C), qkv.dtype),
        grid=(B, nq, nk),
        in_specs=[
            pl.BlockSpec((1, tq, C), q_map),
            pl.BlockSpec((1, tkv, C), k_map),
            pl.BlockSpec((1, tkv, C), v_map),
        ],
        out_specs=pl.BlockSpec((1, tq, C), lambda b, qi, ki: (b, qi, 0)),
        scratch_shapes=[
            pltpu.VMEM((n_head, tq, 1), jnp.float32),   # running max  m
            pltpu.VMEM((n_head, tq, 1), jnp.float32),   # running sum  l
            pltpu.VMEM((n_head, tq, D), jnp.float32),   # output accumulator
        ],
        compiler_params=pltpu.CompilerParams(
            dimension_semantics=("parallel", "parallel", "arbitrary"),
            vmem_limit_bytes=vmem_limit),
        cost_estimate=cost,
    )(*operands)


# ---------------------------------------------------------------------------
# Full CausalSelfAttention forward
# ---------------------------------------------------------------------------
def causal_self_attention(x, w_attn, b_attn, w_proj, b_proj, n_head,
                          *, block_q=None, block_kv=None,
                          block_m=256, block_n=512, block_k=None,
                          compute_dtype=jnp.bfloat16,
                          exp_dtype=jnp.bfloat16):
    B, T, C = x.shape
    # c_attn: fused qkv projection (kept fused; bf16 intermediate in HBM).
    qkv = linear(x.reshape(B * T, C), w_attn, b_attn,
                 out_dtype=compute_dtype, compute_dtype=compute_dtype,
                 block_m=block_m, block_n=block_n, block_k=block_k)
    qkv = qkv.reshape(B, T, 3 * C)
    # attention (attn_dropout: identity in eval mode)
    y = causal_attention_qkv(qkv, n_head, block_q=block_q, block_kv=block_kv,
                             exp_dtype=exp_dtype)
    # c_proj (resid_dropout: identity in eval mode); final output in x.dtype.
    y = linear(y.reshape(B * T, C), w_proj, b_proj,
               out_dtype=x.dtype, compute_dtype=compute_dtype,
               block_m=block_m, block_n=block_n, block_k=block_k)
    return y.reshape(B, T, C)


# ---------------------------------------------------------------------------
# Pure-JAX reference for verification
# ---------------------------------------------------------------------------
def reference(x, w_attn, b_attn, w_proj, b_proj, n_head):
    B, T, C = x.shape
    D = C // n_head
    qkv = x @ w_attn + b_attn
    q, k, v = jnp.split(qkv, 3, axis=2)
    q = q.reshape(B, T, n_head, D).transpose(0, 2, 1, 3)
    k = k.reshape(B, T, n_head, D).transpose(0, 2, 1, 3)
    v = v.reshape(B, T, n_head, D).transpose(0, 2, 1, 3)
    s = jnp.einsum("bhqd,bhkd->bhqk", q, k) / math.sqrt(D)
    mask = jnp.tril(jnp.ones((T, T), dtype=bool))
    s = jnp.where(mask, s, -jnp.inf)
    p = jax.nn.softmax(s, axis=-1)
    y = jnp.einsum("bhqk,bhkd->bhqd", p, v)
    y = y.transpose(0, 2, 1, 3).reshape(B, T, C)
    return y @ w_proj + b_proj


if __name__ == "__main__":
    B, T, C, H = 2, 32, 256, 4      # head dim D = 64

    key = jax.random.PRNGKey(0)
    k1, k2, k3, k4, kx = jax.random.split(key, 5)

    # nn.Linear(C, 3C) / nn.Linear(C, C) weights stored as (in, out) so that
    # forward is x @ W + b (same math as PyTorch's x @ W_t.T + b).
    w_attn = jax.random.normal(k1, (C, 3 * C), jnp.float32) * 0.02
    b_attn = jax.random.normal(k2, (3 * C,), jnp.float32) * 0.02
    w_proj = jax.random.normal(k3, (C, C), jnp.float32) * 0.02
    b_proj = jax.random.normal(k4, (C,), jnp.float32) * 0.02

    x = jax.random.normal(kx, (B, T, C), jnp.float32)

    # Small blocks so the test exercises the real multi-block paths:
    #  - attention: 2x2 q/kv tiles -> diagonal, fully-visible and pruned tiles
    #  - linears:   multi-step K accumulation + multi-tile M/N
    y = causal_self_attention(x, w_attn, b_attn, w_proj, b_proj, H,
                              block_q=16, block_kv=16,
                              block_m=16, block_n=256, block_k=128)
    y = jax.block_until_ready(y)

    y_ref = reference(x, w_attn, b_attn, w_proj, b_proj, H)
    assert y.shape == (B, T, C)
    max_err = float(jnp.max(jnp.abs(y - y_ref)))
    # bf16 MXU operands + bf16 exp + approx reciprocal -> bf16-level tolerance
    # against the f32 reference.
    assert jnp.allclose(y, y_ref, atol=2e-2, rtol=2e-2), (
        f"mismatch vs reference (max abs err {max_err})")

    print("KERNEL_OK")
</pallas_src>

<mosaic_0001>
module attributes {stable_mosaic.version = 11 : i64} {
  func.func @_linear_kernel_acc(%arg0: i32, %arg1: i32, %arg2: i32, %arg3: memref<16x128xbf16, #tpu.memory_space<vmem>>, %arg4: memref<128x256xbf16, #tpu.memory_space<vmem>>, %arg5: memref<1x256xf32, #tpu.memory_space<vmem>>, %arg6: memref<16x256xbf16, #tpu.memory_space<vmem>>, %arg7: memref<16x256xf32, #tpu.memory_space<vmem>>) attributes {dimension_semantics = [#tpu.dimension_semantics<parallel>, #tpu.dimension_semantics<parallel>, #tpu.dimension_semantics<arbitrary>], iteration_bounds = array<i64: 4, 3, 2>, scalar_prefetch = 0 : i64, scratch_operands = 1 : i64, tpu.core_type = #tpu.core_type<tc>, window_params = [{transform_indices = @transform_0, window_bounds = array<i64: 16, 128>}, {transform_indices = @transform_1, window_bounds = array<i64: 128, 256>}, {transform_indices = @transform_2, window_bounds = array<i64: 1, 256>}, {transform_indices = @transform_3, window_bounds = array<i64: 16, 256>}]} {
    %c0_i32 = arith.constant 0 : i32
    %0 = arith.cmpi eq, %arg2, %c0_i32 : i32
    %1 = arith.extui %0 : i1 to i32
    %c0_i32_0 = arith.constant 0 : i32
    %2 = arith.cmpi ne, %1, %c0_i32_0 : i32
    scf.if %2 {
      %cst_9 = arith.constant 0.000000e+00 : f32
      %12 = vector.broadcast %cst_9 : f32 to vector<16x256xf32>
      %c0_10 = arith.constant 0 : index
      %c0_11 = arith.constant 0 : index
      %13 = vector.load %arg7[%c0_10, %c0_11] : memref<16x256xf32, #tpu.memory_space<vmem>>, vector<16x256xf32>
      tpu.vector_store %arg7[%c0_10, %c0_11], %12 {strides = array<i32>} : memref<16x256xf32, #tpu.memory_space<vmem>>, vector<16x256xf32>,
    } else {
    }
    %c0 = arith.constant 0 : index
    %c0_1 = arith.constant 0 : index
    %3 = vector.load %arg7[%c0, %c0_1] : memref<16x256xf32, #tpu.memory_space<vmem>>, vector<16x256xf32>
    %c0_2 = arith.constant 0 : index
    %c0_3 = arith.constant 0 : index
    %4 = vector.load %arg3[%c0_2, %c0_3] : memref<16x128xbf16, #tpu.memory_space<vmem>>, vector<16x128xbf16>
    %c0_4 = arith.constant 0 : index
    %c0_5 = arith.constant 0 : index
    %5 = vector.load %arg4[%c0_4, %c0_5] : memref<128x256xbf16, #tpu.memory_space<vmem>>, vector<128x256xbf16>
    %cst = arith.constant dense<0.000000e+00> : vector<16x256xf32>
    %6 = tpu.matmul %4, %5, %cst {dimension_numbers = #tpu.dot_dimension_numbers<[1], [0], [0], [1], [0, 0, 1, 1], [], []>} : vector<16x128xbf16>, vector<128x256xbf16>, vector<16x256xf32> -> vector<16x256xf32>
    %7 = arith.addf %3, %6 : vector<16x256xf32>
    %c0_6 = arith.constant 0 : index
    %c0_7 = arith.constant 0 : index
    %8 = vector.load %arg7[%c0_6, %c0_7] : memref<16x256xf32, #tpu.memory_space<vmem>>, vector<16x256xf32>
    tpu.vector_store %arg7[%c0_6, %c0_7], %7 {strides = array<i32>} : memref<16x256xf32, #tpu.memory_space<vmem>>, vector<16x256xf32>,
    %c1_i32 = arith.constant 1 : i32
    %9 = arith.cmpi eq, %arg2, %c1_i32 : i32
    %10 = arith.extui %9 : i1 to i32
    %c0_i32_8 = arith.constant 0 : i32
    %11 = arith.cmpi ne, %10, %c0_i32_8 : i32
    scf.if %11 {
      %c0_9 = arith.constant 0 : index
      %c0_10 = arith.constant 0 : index
      %12 = vector.load %arg7[%c0_9, %c0_10] : memref<16x256xf32, #tpu.memory_space<vmem>>, vector<16x256xf32>
      %c0_11 = arith.constant 0 : index
      %c0_12 = arith.constant 0 : index
      %13 = vector.load %arg5[%c0_11, %c0_12] : memref<1x256xf32, #tpu.memory_space<vmem>>, vector<1x256xf32>
      %14 = vector.broadcast %13 : vector<1x256xf32> to vector<16x256xf32>
      %15 = arith.addf %12, %14 : vector<16x256xf32>
      %16 = arith.truncf %15 : vector<16x256xf32> to vector<16x256xbf16>
      %c0_13 = arith.constant 0 : index
      %c0_14 = arith.constant 0 : index
      %17 = vector.load %arg6[%c0_13, %c0_14] : memref<16x256xbf16, #tpu.memory_space<vmem>>, vector<16x256xbf16>
      tpu.vector_store %arg6[%c0_13, %c0_14], %16 {strides = array<i32>} : memref<16x256xbf16, #tpu.memory_space<vmem>>, vector<16x256xbf16>,
    } else {
    }
    return
  }
  func.func @transform_0(%arg0: i32, %arg1: i32, %arg2: i32) -> (i32, i32) {
    %c0_i32 = arith.constant 0 : i32
    return %arg0, %arg2 : i32, i32
  }
  func.func @transform_1(%arg0: i32, %arg1: i32, %arg2: i32) -> (i32, i32) {
    %c0_i32 = arith.constant 0 : i32
    return %arg2, %arg1 : i32, i32
  }
  func.func @transform_2(%arg0: i32, %arg1: i32, %arg2: i32) -> (i32, i32) {
    %c0_i32 = arith.constant 0 : i32
    %c0_i32_0 = arith.constant 0 : i32
    return %c0_i32, %arg1 : i32, i32
  }
  func.func @transform_3(%arg0: i32, %arg1: i32, %arg2: i32) -> (i32, i32) {
    %c0_i32 = arith.constant 0 : i32
    return %arg0, %arg1 : i32, i32
  }
}

</mosaic_0001>

<llo_original>
// kernel: tpu_custom_call.1
$region0: #{tpu_custom_call.1}
  #allocation0 [shape = 'u32[]', space=smem, size = 0x4, offset = 0x4, fixed_abs, tag = 'smem constant byte address 0x4 - core index']
  #allocation1 [shape = 'u32[144,128]{1,0:T(1,128)}', space=vmem, size = 0x12000, scoped, tag = 'internal scratch']
  #allocation2 [shape = 'f32[16,256]{1,0:T(8,128)}', space=vmem, size = 0x4000, scoped, tag = 'scratch operand']
  %s0 = inlined_call_operand.hbm [shape: bf16[64,256], index: 0, kind: input, shape index: {}]
  %s1 = inlined_call_operand.hbm [shape: bf16[256,768], index: 1, kind: input, shape index: {}]
  %s2 = inlined_call_operand.vmem [shape: f32[1,768], index: 2, kind: input, shape index: {}]
  %s3 = inlined_call_operand.hbm [shape: bf16[64,768], index: 3, kind: output, shape index: {}]
  %s4 = sld [smem:[#allocation0]]
  $region61: #{tpu_custom_call.1} parent=0
    _
  %s6 = ssub.s32 1, %s4
  %s7 = scalar_select 0, %s6, %s4
  $region1: #{tpu_custom_call.1} parent=0
    #allocation3 [shape = 'u8[8192]{0}', space=vmem, size = 0x2000, scoped, tag = 'input window, operand 0']
    #allocation4 [shape = 's32[2]{0}', space=sflag, size = 0x8, scoped, tag = 'scoped memory for tpu_custom_call.1']
    #allocation5 [shape = 's32[2]{0}', space=sflag, size = 0x8, scoped, tag = 'scoped memory for tpu_custom_call.1']
    #allocation6 [shape = 'u8[131072]{0}', space=vmem, size = 0x20000, scoped, tag = 'input window, operand 1']
    #allocation7 [shape = 's32[2]{0}', space=sflag, size = 0x8, scoped, tag = 'scoped memory for tpu_custom_call.1']
    #allocation8 [shape = 'u8[16384]{0}', space=vmem, size = 0x4000, scoped, tag = 'output window, operand 0']
    %8 = vsyncpa [#allocation4], 0
    %s9 = scalar_lea.sflag [#allocation4], 1
    %10 = vsyncpa %s9, 0
    %11 = vsyncpa [#allocation7], 0
    %s12 = scalar_lea.sflag [#allocation7], 1
    %13 = vsyncpa %s12, 0
    %14 = vsyncpa [#allocation5], 0
    %s15 = scalar_lea.sflag [#allocation5], 1
    %16 = vsyncpa %s15, 0
    loop: start=0, step=1, limit=26
    $region2: #{tpu_custom_call.1} parent=1 // loop_pre_header
      _
    $region3: #{tpu_custom_call.1} parent=1 // loop_header
      %s18 = sphi 0, %s22
      %p19 = scmp.ge.s32.totalorder %s18, 26
      %s25 = sphi 0, %s44
      %s26 = sphi 0, %s40
      %s27 = sphi 0, %s36
      %s28 = sphi 0, %s25
      %s29 = sphi 0, %s26
      %s30 = sphi 0, %s27
      %s31 = sphi 0, %s28
      %s32 = sphi 0, %s29
      %s33 = sphi 0, %s30
      %s49 = sphi 0, %s51
      %s52 = sphi 0, %s49
      %s53 = sphi 0, %s52
      %s69 = sphi 0, %s53
      %s77 = sphi 0, %s79
      %s80 = sphi 0, %s77
      %s81 = sphi 0, %s80
      %s97 = sphi 0, %s81
      %s103 = sphi 0, %s105
      %s106 = sphi 0, %s103
      %s107 = sphi 0, %s106
      %s123 = sphi 0, %s107
      %s131 = sphi 0, %s133
      %s134 = sphi 0, %s131
      %s135 = sphi 0, %s134
      %s151 = sphi 0, %s135
    $region4: #{tpu_custom_call.1} parent=1 // loop_header_branch
      %21 = sbr.rel (%p19) target = $region8
    $region5: #{tpu_custom_call.1} parent=1 // loop_body
      %s23 = ssub.s32 %s18, 1
      %s24 = ssub.s32 %s18, 2
      %s34 = sadd.s32 1, %s27
      %p35 = scmp.ge.s32.totalorder %s34, 2
      %s36 = scalar_select %p35, 0, %s34
      %s37 = sadd.s32 1, %s26
      %s38 = scalar_select %p35, %s37, %s26
      %p39 = scmp.ge.s32.totalorder %s38, 3
      %s40 = scalar_select %p39, 0, %s38
      %s41 = sadd.s32 1, %s25
      %s42 = scalar_select %p39, %s41, %s25
      %p43 = scmp.ge.s32.totalorder %s42, 4
      %s44 = scalar_select %p43, 0, %s42
      %s45 = ssub.s32 %s25, %s44
      %s46 = ssub.s32 %s27, %s36
      %s47 = sor.u32 %s45, %s46
      %p48 = scmp.eq.s32.totalorder %s47, 0
      %s50 = sadd.s32 %s49, 1
      %s51 = scalar_select %p48, %s49, %s50
      %p54 = pneg %p48
      %p55 = scmp.eq.s32.totalorder %s18, 23
      %p56 = por %p54, %p55
      %p57 = scmp.ne.s32.totalorder %s49, %s52
      %p58 = scmp.eq.s32.totalorder %s18, 0
      %p59 = por %p57, %p58
      %p60 = scmp.ne.s32.totalorder %s49, %s52
      %p61 = scmp.eq.s32.totalorder %s23, 23
      %p62 = por %p60, %p61
      %p63 = scmp.ne.s32.totalorder %s52, %s53
      %p64 = scmp.eq.s32.totalorder %s23, 0
      %p65 = por %p63, %p64
      %p66 = scmp.ne.s32.totalorder %s52, %s53
      %p67 = scmp.eq.s32.totalorder %s24, 23
      %p68 = por %p66, %p67
      %p70 = scmp.ne.s32.totalorder %s53, %s69
      %p71 = scmp.eq.s32.totalorder %s24, 0
      %p72 = por %p70, %p71
      %s73 = ssub.s32 %s27, %s36
      %s74 = ssub.s32 %s26, %s40
      %s75 = sor.u32 %s73, %s74
      %p76 = scmp.eq.s32.totalorder %s75, 0
      %s78 = sadd.s32 %s77, 1
      %s79 = scalar_select %p76, %s77, %s78
      %p82 = pneg %p76
      %p83 = scmp.eq.s32.totalorder %s18, 23
      %p84 = por %p82, %p83
      %p85 = scmp.ne.s32.totalorder %s77, %s80
      %p86 = scmp.eq.s32.totalorder %s18, 0
      %p87 = por %p85, %p86
      %p88 = scmp.ne.s32.totalorder %s77, %s80
      %p89 = scmp.eq.s32.totalorder %s23, 23
      %p90 = por %p88, %p89
      %p91 = scmp.ne.s32.totalorder %s80, %s81
      %p92 = scmp.eq.s32.totalorder %s23, 0
      %p93 = por %p91, %p92
      %p94 = scmp.ne.s32.totalorder %s80, %s81
      %p95 = scmp.eq.s32.totalorder %s24, 23
      %p96 = por %p94, %p95
      %p98 = scmp.ne.s32.totalorder %s81, %s97
      %p99 = scmp.eq.s32.totalorder %s24, 0
      %p100 = por %p98, %p99
      %s101 = ssub.s32 %s26, %s40
      %p102 = scmp.eq.s32.totalorder %s101, 0
      %s104 = sadd.s32 %s103, 1
      %s105 = scalar_select %p102, %s103, %s104
      %p108 = pneg %p102
      %p109 = scmp.eq.s32.totalorder %s18, 23
      %p110 = por %p108, %p109
      %p111 = scmp.ne.s32.totalorder %s103, %s106
      %p112 = scmp.eq.s32.totalorder %s18, 0
      %p113 = por %p111, %p112
      %p114 = scmp.ne.s32.totalorder %s103, %s106
      %p115 = scmp.eq.s32.totalorder %s23, 23
      %p116 = por %p114, %p115
      %p117 = scmp.ne.s32.totalorder %s106, %s107
      %p118 = scmp.eq.s32.totalorder %s23, 0
      %p119 = por %p117, %p118
      %p120 = scmp.ne.s32.totalorder %s106, %s107
      %p121 = scmp.eq.s32.totalorder %s24, 23
      %p122 = por %p120, %p121
      %p124 = scmp.ne.s32.totalorder %s107, %s123
      %p125 = scmp.eq.s32.totalorder %s24, 0
      %p126 = por %p124, %p125
      %s127 = ssub.s32 %s25, %s44
      %s128 = ssub.s32 %s26, %s40
      %s129 = sor.u32 %s127, %s128
      %p130 = scmp.eq.s32.totalorder %s129, 0
      %s132 = sadd.s32 %s131, 1
      %s133 = scalar_select %p130, %s131, %s132
      %p136 = pneg %p130
      %p137 = scmp.eq.s32.totalorder %s18, 23
      %p138 = por %p136, %p137
      %p139 = scmp.ne.s32.totalorder %s131, %s134
      %p140 = scmp.eq.s32.totalorder %s18, 0
      %p141 = por %p139, %p140
      %p142 = scmp.ne.s32.totalorder %s131, %s134
      %p143 = scmp.eq.s32.totalorder %s23, 23
      %p144 = por %p142, %p143
      %p145 = scmp.ne.s32.totalorder %s134, %s135
      %p146 = scmp.eq.s32.totalorder %s23, 0
      %p147 = por %p145, %p146
      %p148 = scmp.ne.s32.totalorder %s134, %s135
      %p149 = scmp.eq.s32.totalorder %s24, 23
      %p150 = por %p148, %p149
      %p152 = scmp.ne.s32.totalorder %s135, %s151
      %p153 = scmp.eq.s32.totalorder %s24, 0
      %p154 = por %p152, %p153
      %p155 = scmp.le.s32.totalorder 1, %s18
      %p156 = scmp.lt.s32.totalorder %s18, 25
      %p157 = pnand %p155, %p156
      %p158 = pneg %p157
      // Predicated region
      $region9: #{tpu_custom_call.1} parent=5 // pred_check
        _
      $region10: #{tpu_custom_call.1} parent=5 // pred_check_branch
        %160 = sbr.rel (%p157) target = $region12
      $region11: #{tpu_custom_call.1} parent=5 // pred_region
        %s161 = ssub.s32 %s18, 1
      $region12: #{tpu_custom_call.1} parent=5 // pred_fallthru
        _
      %p162 = scmp.lt.s32.totalorder %s18, 24
      // Predicated region
      $region13: #{tpu_custom_call.1} parent=5 // pred_check
        %p163 = pneg %p162
      $region14: #{tpu_custom_call.1} parent=5 // pred_check_branch
        %165 = sbr.rel (%p163) target = $region16
      $region15: #{tpu_custom_call.1} parent=5 // pred_region
        // Predicated region
        $region17: #{tpu_custom_call.1} parent=15 // pred_check
          %p166 = pneg %p59
        $region18: #{tpu_custom_call.1} parent=15 // pred_check_branch
          %168 = sbr.rel (%p166) target = $region20
        $region19: #{tpu_custom_call.1} parent=15 // pred_region
          %s169 = sand.u32 %s49, 1
          %s170 = scalar_lea.sflag [#allocation4], %s169
          %s171 = sand.u32 %s49, 1
          %s172 = smul.addr %s171, 8
          %s173 = scalar_lea.vmem [#allocation3], %s172
          %s174 = smul.u32 2, %s25
          %s176 = ssub.s32 128, 128
          %177 = vsyncadd %s170, %s176
          %s178 = smul.addr %s174, 2
          %s179 = sadd.s32 %s27, %s178
          %s180 = smul.addr %s179, 64
          %s181 = scalar_lea.hbm %s0, %s180
          %s182 = sshll.u32 %s173, 4
          %s183 = int_to_ptr.vmem [resolvable:$true] %s182
          %188 = dma.hbm_to_vmem [thread:$0]  %s181, 128, %s183, %s170, 128, 64, 4
        $region20: #{tpu_custom_call.1} parent=15 // pred_fallthru
          _
        // Predicated region
        $region21: #{tpu_custom_call.1} parent=15 // pred_check
          %p189 = pneg %p87
        $region22: #{tpu_custom_call.1} parent=15 // pred_check_branch
          %191 = sbr.rel (%p189) target = $region24
        $region23: #{tpu_custom_call.1} parent=15 // pred_region
          %s192 = sand.u32 %s77, 1
          %s193 = scalar_lea.sflag [#allocation7], %s192
          %s194 = sand.u32 %s77, 1
          %s195 = smul.addr %s194, 128
          %s196 = scalar_lea.vmem [#allocation6], %s195
          %s197 = smul.u32 16, %s27
          %s198 = smul.u32 2, %s26
          %s200 = ssub.s32 2048, 2048
          %201 = vsyncadd %s193, %s200
          %s202 = smul.addr %s197, 6
          %s203 = sadd.s32 %s198, %s202
          %s204 = smul.addr %s203, 64
          %s205 = scalar_lea.hbm %s1, %s204
          %s206 = sshll.u32 %s196, 4
          %s207 = int_to_ptr.vmem [resolvable:$true] %s206
          %212 = dma.hbm_to_vmem [thread:$0]  %s205, 2048, %s207, %s193, 384, 128, 8
        $region24: #{tpu_custom_call.1} parent=15 // pred_fallthru
          _
        // Predicated region
        $region25: #{tpu_custom_call.1} parent=15 // pred_check
          %p213 = pneg %p113
        $region26: #{tpu_custom_call.1} parent=15 // pred_check_branch
          %215 = sbr.rel (%p213) target = $region28
        $region27: #{tpu_custom_call.1} parent=15 // pred_region
          %s216 = smul.u32 2, %s26
          %p217 = scmp.lt.s32.totalorder %s216, 5
          %s218 = scalar_select %p217, %s216, 5
          %s219 = scalar_lea.vmem %s2, %s218
          %s220 = smul.u32 2, %s26
        $region28: #{tpu_custom_call.1} parent=15 // pred_fallthru
          _
      $region16: #{tpu_custom_call.1} parent=5 // pred_fallthru
        _
      %p221 = scmp.le.s32.totalorder 1, %s18
      %p222 = scmp.lt.s32.totalorder %s18, 25
      %p223 = pnand %p221, %p222
      %p224 = pneg %p223
      // Predicated region
      $region29: #{tpu_custom_call.1} parent=5 // pred_check
        _
      $region30: #{tpu_custom_call.1} parent=5 // pred_check_branch
        %226 = sbr.rel (%p223) target = $region32
      $region31: #{tpu_custom_call.1} parent=5 // pred_region
        %s227 = ssub.s32 %s18, 1
        %s228 = sand.u32 %s52, 1
        %s229 = scalar_lea.sflag [#allocation4], %s228
        %s230 = sand.u32 %s52, 1
        %s231 = smul.addr %s230, 8
        %s232 = scalar_lea.vmem [#allocation3], %s231
        // Predicated region
        $region33: #{tpu_custom_call.1} parent=31 // pred_check
          %p233 = pneg %p65
        $region34: #{tpu_custom_call.1} parent=31 // pred_check_branch
          %235 = sbr.rel (%p233) target = $region36
        $region35: #{tpu_custom_call.1} parent=31 // pred_region
          %236 = dma.done %s229, 128
        $region36: #{tpu_custom_call.1} parent=31 // pred_fallthru
          _
        %s237 = sand.u32 %s80, 1
        %s238 = scalar_lea.sflag [#allocation7], %s237
        %s239 = sand.u32 %s80, 1
        %s240 = smul.addr %s239, 128
        %s241 = scalar_lea.vmem [#allocation6], %s240
        // Predicated region
        $region37: #{tpu_custom_call.1} parent=31 // pred_check
          %p242 = pneg %p93
        $region38: #{tpu_custom_call.1} parent=31 // pred_check_branch
          %244 = sbr.rel (%p242) target = $region40
        $region39: #{tpu_custom_call.1} parent=31 // pred_region
          %245 = dma.done %s238, 2048
        $region40: #{tpu_custom_call.1} parent=31 // pred_fallthru
          _
        %s246 = sand.u32 %s52, 1
        %s247 = scalar_lea.sflag [#allocation4], %s246
        %s248 = sand.u32 %s52, 1
        %s249 = smul.addr %s248, 8
        %s250 = scalar_lea.vmem [#allocation3], %s249
        %p251 = pneg %p65
        %p252 = pneg %p62
        %s253 = sand.u32 %s80, 1
        %s254 = scalar_lea.sflag [#allocation7], %s253
        %s255 = sand.u32 %s80, 1
        %s256 = smul.addr %s255, 128
        %s257 = scalar_lea.vmem [#allocation6], %s256
        %p258 = pneg %p93
        %p259 = pneg %p90
        %s260 = smul.u32 2, %s29
        %p261 = scmp.lt.s32.totalorder %s260, 5
        %s262 = scalar_select %p261, %s260, 5
        %s263 = scalar_lea.vmem %s2, %s262
        %p264 = pneg %p119
        %p265 = pneg %p116
        %p266 = pneg %p147
        %p267 = pneg %p144
        %s268 = sand.u32 %s134, 1
        %s269 = scalar_lea.sflag [#allocation5], %s268
        %s270 = sand.u32 %s134, 1
        %s271 = smul.addr %s270, 16
        %s272 = scalar_lea.vmem [#allocation8], %s271
        %s273 = smul.u32 2, %s28
        %s274 = smul.u32 16, %s30
        %s275 = smul.u32 2, %s29
        %s276 = smul.u32 2, %s29
        %p277 = scmp.lt.s32.totalorder %s276, 5
        %s278 = scalar_select %p277, %s276, 5
        %s279 = scalar_lea.vmem %s2, %s278
        %s280 = smul.u32 2, %s29
        %s281 = smul.u32 2, %s28
        %s282 = smul.u32 2, %s29
        %p284 = scmp.eq.s32.totalorder %s30, 0
        // Predicated region
        $region41: #{tpu_custom_call.1} parent=31 // pred_check
          %p285 = pneg %p284
        $region42: #{tpu_custom_call.1} parent=31 // pred_check_branch
          %287 = sbr.rel (%p285) target = $region44
        $region43: #{tpu_custom_call.1} parent=31 // pred_region
          %288 = vst [vmem:[#allocation2] sm:$0xff] 0.0
          %289 = vst [vmem:[#allocation2 + $0x8] sm:$0xff] 0.0
          %290 = vst [vmem:[#allocation2 + $0x10] sm:$0xff] 0.0
          %291 = vst [vmem:[#allocation2 + $0x18] sm:$0xff] 0.0
        $region44: #{tpu_custom_call.1} parent=31 // pred_fallthru
          _
        %v292 = vld [vmem:[#allocation2] sm:$0xff]
        %v293 = vld [vmem:[#allocation2 + $0x8] sm:$0xff]
        %v294 = vld [vmem:[#allocation2 + $0x10] sm:$0xff]
        %v295 = vld [vmem:[#allocation2 + $0x18] sm:$0xff]
        %v296 = vld [vmem:[%s232] sm:$0xf]
        %v297 = vld [vmem:[%s232 + $0x4] sm:$0xf]
        %v298 = vld [vmem:[%s241] sm:$0xff]
        %v299 = vld [vmem:[%s241 + $0x8] sm:$0xff]
        %v300 = vld [vmem:[%s241 + $0x10] sm:$0xff]
        %v301 = vld [vmem:[%s241 + $0x18] sm:$0xff]
        %v302 = vld [vmem:[%s241 + $0x20] sm:$0xff]
        %v303 = vld [vmem:[%s241 + $0x28] sm:$0xff]
        %v304 = vld [vmem:[%s241 + $0x30] sm:$0xff]
        %v305 = vld [vmem:[%s241 + $0x38] sm:$0xff]
        %v306 = vld [vmem:[%s241 + $0x40] sm:$0xff]
        %v307 = vld [vmem:[%s241 + $0x48] sm:$0xff]
        %v308 = vld [vmem:[%s241 + $0x50] sm:$0xff]
        %v309 = vld [vmem:[%s241 + $0x58] sm:$0xff]
        %v310 = vld [vmem:[%s241 + $0x60] sm:$0xff]
        %v311 = vld [vmem:[%s241 + $0x68] sm:$0xff]
        %v312 = vld [vmem:[%s241 + $0x70] sm:$0xff]
        %v313 = vld [vmem:[%s241 + $0x78] sm:$0xff]
        %v316 = vunpack.c.l.b16 %v296
        %v317 = vunpack.c.l.b16 %v297
        %v318 = vpack.c.b16 %v317, %v316
        %v336 = vunpack.c.l.b16 %v298
        %v337 = vunpack.c.h.b16 %v298
        %v338 = vunpack.c.l.b16 %v299
        %v339 = vunpack.c.h.b16 %v299
        %v340 = vunpack.c.l.b16 %v300
        %v341 = vunpack.c.h.b16 %v300
        %v342 = vunpack.c.l.b16 %v301
        %v343 = vunpack.c.h.b16 %v301
        %v344 = vunpack.c.l.b16 %v302
        %v345 = vunpack.c.h.b16 %v302
        %v346 = vunpack.c.l.b16 %v303
        %v347 = vunpack.c.h.b16 %v303
        %v348 = vunpack.c.l.b16 %v304
        %v349 = vunpack.c.h.b16 %v304
        %v350 = vunpack.c.l.b16 %v305
        %v351 = vunpack.c.h.b16 %v305
        %v352 = vunpack.c.l.b16 %v306
        %v353 = vunpack.c.h.b16 %v306
        %v354 = vunpack.c.l.b16 %v307
        %v355 = vunpack.c.h.b16 %v307
        %v356 = vunpack.c.l.b16 %v308
        %v357 = vunpack.c.h.b16 %v308
        %v358 = vunpack.c.l.b16 %v309
        %v359 = vunpack.c.h.b16 %v309
        %v360 = vunpack.c.l.b16 %v310
        %v361 = vunpack.c.h.b16 %v310
        %v362 = vunpack.c.l.b16 %v311
        %v363 = vunpack.c.h.b16 %v311
        %v364 = vunpack.c.l.b16 %v312
        %v365 = vunpack.c.h.b16 %v312
        %v366 = vunpack.c.l.b16 %v313
        %v367 = vunpack.c.h.b16 %v313
        %v368 = vpack.c.b16 %v338, %v336
        %v369 = vpack.c.b16 %v339, %v337
        %v370 = vpack.c.b16 %v342, %v340
        %v371 = vpack.c.b16 %v343, %v341
        %v372 = vpack.c.b16 %v346, %v344
        %v373 = vpack.c.b16 %v347, %v345
        %v374 = vpack.c.b16 %v350, %v348
        %v375 = vpack.c.b16 %v351, %v349
        %v376 = vpack.c.b16 %v354, %v352
        %v377 = vpack.c.b16 %v355, %v353
        %v378 = vpack.c.b16 %v358, %v356
        %v379 = vpack.c.b16 %v359, %v357
        %v380 = vpack.c.b16 %v362, %v360
        %v381 = vpack.c.b16 %v363, %v361
        %v382 = vpack.c.b16 %v366, %v364
        %v383 = vpack.c.b16 %v367, %v365
        %400 = vmatprep.subr.bf16.mxu0 %v369
        %401 = vmatpush1.bf16.msra.mxu0 %v368
        %402 = vmatprep.subr.bf16.mxu0 %v371
        %403 = vmatpush1.bf16.msra.mxu0 %v370
        %404 = vmatprep.subr.bf16.mxu0 %v373
        %405 = vmatpush1.bf16.msra.mxu0 %v372
        %406 = vmatprep.subr.bf16.mxu0 %v375
        %407 = vmatpush1.bf16.msra.mxu0 %v374
        %408 = vmatprep.subr.bf16.mxu0 %v377
        %409 = vmatpush1.bf16.msra.mxu0 %v376
        %410 = vmatprep.subr.bf16.mxu0 %v379
        %411 = vmatpush1.bf16.msra.mxu0 %v378
        %412 = vmatprep.subr.bf16.mxu0 %v381
        %413 = vmatpush1.bf16.msra.mxu0 %v380
        %414 = vmatprep.subr.bf16.mxu0 %v383
        %415 = vmatpush1.bf16.msra.mxu0 %v382
        %416 = vmatprep.subr.bf16.mxu0 0
        %417 = vmatpush1.bf16.msra.mxu0 0
        %418 = vmatprep.subr.bf16.mxu0 0
        %419 = vmatpush1.bf16.msra.mxu0 0
        %420 = vmatprep.subr.bf16.mxu0 0
        %421 = vmatpush1.bf16.msra.mxu0 0
        %422 = vmatprep.subr.bf16.mxu0 0
        %423 = vmatpush1.bf16.msra.mxu0 0
        %424 = vmatprep.subr.bf16.mxu0 0
        %425 = vmatpush1.bf16.msra.mxu0 0
        %426 = vmatprep.subr.bf16.mxu0 0
        %427 = vmatpush1.bf16.msra.mxu0 0
        %428 = vmatprep.subr.bf16.mxu0 0
        %429 = vmatpush1.bf16.msra.mxu0 0
        %430 = vmatprep.subr.bf16.mxu0 0
        %431 = vmatpush1.bf16.msra.mxu0 0
        %432 = vmatprep.mubr.bf16.mxu0 0
        %433 = vmatmul.mubr.bf16.gmra.mrb[0].mxu0 %v318
        %v434 = vpop.f32.mrb[0].mxu0
        %v435 = vadd.f32 0.0, %v434
        %v436 = vpop.f32.mrb[0].mxu0
        %v437 = vadd.f32 0.0, %v436
        %v438 = vpop.f32.mrb[0].mxu0
        %v439 = vadd.f32 0.0, %v438
        %v440 = vpop.f32.mrb[0].mxu0
        %v441 = vadd.f32 0.0, %v440
        %442 = vdwg.mxu0
        %v443 = vadd.f32 %v292, %v435
        %v444 = vadd.f32 %v293, %v437
        %v445 = vadd.f32 %v294, %v439
        %v446 = vadd.f32 %v295, %v441
        %447 = vst [vmem:[#allocation2] sm:$0xff] %v443
        %448 = vst [vmem:[#allocation2 + $0x8] sm:$0xff] %v444
        %449 = vst [vmem:[#allocation2 + $0x10] sm:$0xff] %v445
        %450 = vst [vmem:[#allocation2 + $0x18] sm:$0xff] %v446
        %p451 = scmp.eq.s32.totalorder %s30, 1
        // Predicated region
        $region45: #{tpu_custom_call.1} parent=31 // pred_check
          %p452 = pneg %p451
        $region46: #{tpu_custom_call.1} parent=31 // pred_check_branch
          %454 = sbr.rel (%p452) target = $region48
        $region47: #{tpu_custom_call.1} parent=31 // pred_region
          %v455 = vld [vmem:[#allocation2] sm:$0xff]
          %v456 = vld [vmem:[#allocation2 + $0x8] sm:$0xff]
          %v457 = vld [vmem:[#allocation2 + $0x10] sm:$0xff]
          %v458 = vld [vmem:[#allocation2 + $0x18] sm:$0xff]
          %v459 = vld [vmem:[%s279] sm:$0x3]
          %v461 = vlaneseq
          %v462 = vshrl.u32 %v461, 7
          %v463 = vsub.s32 0, %v462
          %v464 = vrot.slane %v459, %v463
          %v465 = vlaneseq
          %v466 = vshrl.u32 %v465, 7
          %v467 = vsub.s32 1, %v466
          %v468 = vrot.slane %v459, %v467
          %v471 = vadd.f32 %v455, %v464
          %v472 = vadd.f32 %v456, %v468
          %v473 = vadd.f32 %v457, %v464
          %v474 = vadd.f32 %v458, %v468
          %v475 = vpack.c.bf16 %v473, %v471
          %v476 = vpack.c.bf16 %v474, %v472
          %v479 = vunpack.c.l.b16 %v475
          %v480 = vunpack.c.l.b16 %v476
          %v481 = vunpack.c.h.b16 %v475
          %v482 = vunpack.c.h.b16 %v476
          %v483 = vpack.c.b16 %v480, %v479
          %v484 = vpack.c.b16 %v482, %v481
          %487 = vst [vmem:[%s272] sm:$0xff] %v483
          %488 = vst [vmem:[%s272 + $0x8] sm:$0xff] %v484
        $region48: #{tpu_custom_call.1} parent=31 // pred_fallthru
          _
        %s489 = sand.u32 %s134, 1
        %s490 = scalar_lea.sflag [#allocation5], %s489
        %s491 = sand.u32 %s134, 1
        %s492 = smul.addr %s491, 16
        %s493 = scalar_lea.vmem [#allocation8], %s492
        // Predicated region
        $region49: #{tpu_custom_call.1} parent=31 // pred_check
          %p494 = pneg %p144
        $region50: #{tpu_custom_call.1} parent=31 // pred_check_branch
          %496 = sbr.rel (%p494) target = $region52
        $region51: #{tpu_custom_call.1} parent=31 // pred_region
          %s497 = smul.u32 2, %s28
          %s498 = smul.u32 2, %s29
          %s500 = ssub.s32 256, 256
          %501 = vsyncadd %s490, %s500
          %s502 = smul.addr %s497, 6
          %s503 = sadd.s32 %s498, %s502
          %s504 = smul.addr %s503, 64
          %s505 = scalar_lea.hbm %s3, %s504
          %s506 = sshll.u32 %s493, 4
          %s507 = int_to_ptr.vmem [resolvable:$true] %s506
          %512 = dma.vmem_to_hbm [thread:$0]  %s507, 256, %s505, %s490, 128, 384, 8
        $region52: #{tpu_custom_call.1} parent=31 // pred_fallthru
          _
      $region32: #{tpu_custom_call.1} parent=5 // pred_fallthru
        _
      %p513 = scmp.le.s32.totalorder 2, %s18
      // Predicated region
      $region53: #{tpu_custom_call.1} parent=5 // pred_check
        %p514 = pneg %p513
      $region54: #{tpu_custom_call.1} parent=5 // pred_check_branch
        %516 = sbr.rel (%p514) target = $region56
      $region55: #{tpu_custom_call.1} parent=5 // pred_region
        %s517 = ssub.s32 %s18, 2
        // Predicated region
        $region57: #{tpu_custom_call.1} parent=55 // pred_check
          %p518 = pneg %p150
        $region58: #{tpu_custom_call.1} parent=55 // pred_check_branch
          %520 = sbr.rel (%p518) target = $region60
        $region59: #{tpu_custom_call.1} parent=55 // pred_region
          %s521 = sand.u32 %s135, 1
          %s522 = scalar_lea.sflag [#allocation5], %s521
          %s523 = sand.u32 %s135, 1
          %s524 = smul.addr %s523, 16
          %s525 = scalar_lea.vmem [#allocation8], %s524
          %526 = dma.done %s522, 256
        $region60: #{tpu_custom_call.1} parent=55 // pred_fallthru
          _
      $region56: #{tpu_custom_call.1} parent=5 // pred_fallthru
        _
    $region6: #{tpu_custom_call.1} parent=1 // loop_footer
      %s22 = sadd.s32 1, %s18
    $region7: #{tpu_custom_call.1} parent=1 // loop_footer_branch
      %17 = sbr.rel target = $region3
    $region8: #{tpu_custom_call.1} parent=1 // loop_exit
      _
    %527 = vsyncpa [#allocation4], 1
    %s528 = scalar_lea.sflag [#allocation4], 1
    %529 = vsyncpa %s528, 1
    %530 = vsyncpa [#allocation7], 1
    %s531 = scalar_lea.sflag [#allocation7], 1
    %532 = vsyncpa %s531, 1
    %533 = vsyncpa [#allocation5], 1
    %s534 = scalar_lea.sflag [#allocation5], 1
    %535 = vsyncpa %s534, 1

</llo_original>
